<compile_context>
chip_gen: v6e
topology: v6e:2x2x1
jax: 0.10.0
libtpu: 0.0.40
codegen_flags: <defaults>
</compile_context>

<pallas_src>
import math
import functools

import jax
import jax.numpy as jnp
from jax.experimental import pallas as pl
from jax.experimental.pallas import tpu as pltpu


def compute_offset_scale_shift(offset, scale, num_bits_scale=1):
    """Decompose float scale into (integer mult, power-of-two shift_mult)."""
    shift = math.ceil(math.log2(scale)) - (num_bits_scale - 1)
    mult = int(round(scale / (2.0 ** shift)))
    mult = max(1, min(mult, 2 ** num_bits_scale - 1))
    shift_mult = 2.0 ** shift
    return float(offset), float(mult), float(shift_mult)


def _sublane_multiple(itemsize):
    # f32 -> 8, bf16/f16/i16 -> 16, int8/u8 -> 32 (narrow dtypes pack sublanes).
    return {4: 8, 2: 16, 1: 32}[itemsize]


def _round_up(x, m):
    return -(-x // m) * m


def _cdiv(a, b):
    return -(-a // b)


def _choose_tiles(NC, HW, itemsize, vmem_budget_bytes=None):
    """Pick (row_tile, hw_tile) so that the double-buffered input blocks, the
    lane-padded (rows, 1)->128-lane output double-buffers and the f32
    accumulator scratch all fit the VMEM budget."""
    sub = _sublane_multiple(itemsize)
    if vmem_budget_bytes is None:
        try:
            cap = pltpu.get_tpu_info().vmem_capacity_bytes
        except Exception:
            cap = 64 * 1024 * 1024            # conservative (v7x physical VMEM)
        # Total footprint budget; comfortably under every generation's scoped
        # default; we also raise vmem_limit_bytes explicitly in the wrapper.
        vmem_budget_bytes = min(cap // 8, 12 * 1024 * 1024)
    budget = max(int(vmem_budget_bytes), 4096)

    lane_hw = _round_up(HW, 128)              # lane padding to 128
    out_acc_per_row = 3 * 128 * 4             # 2 out buffers + 1 acc row (f32, padded)

    # Row-tile cap: <=1024 rows, sublane-multiple blocks, and at least 2 row
    # tiles when NC allows it (second v7x TensorCore gets work on the
    # "parallel" row axis; negligible cost on single-TC v5e/v6e).
    if NC <= sub:
        row_cap = NC                          # full-dim block: always legal
    else:
        row_cap = min(1024, _round_up(NC, sub), _round_up(_cdiv(NC, 2), sub))
    min_rows = min(row_cap, sub)

    # Path 1: whole reduction axis in a single k step (hw_tile == HW).
    per_row_full = 2 * lane_hw * itemsize + 2 * 128 * 4    # no acc scratch needed
    rows_affordable = budget // per_row_full
    if rows_affordable >= min_rows:
        hw_tile = HW
        row_tile = min(row_cap, max(min_rows, (rows_affordable // sub) * sub))
        return row_tile, hw_tile

    # Path 2: huge H*W — tile the reduction axis.  Pick hw_tile first
    # (>= 512 lanes when affordable => long contiguous HBM bursts, fewer grid
    # steps), then derive row_tile from the remaining budget.
    avail_per_row = budget // min_rows - out_acc_per_row
    hw_tile = (max(avail_per_row, 0) // (2 * itemsize)) // 128 * 128
    hw_tile = max(128, min(hw_tile, lane_hw))
    if hw_tile < 512:
        want = min(512, lane_hw)
        if min_rows * (2 * want * itemsize + out_acc_per_row) <= budget:
            hw_tile = want
    rows_affordable = budget // (2 * hw_tile * itemsize + out_acc_per_row)
    row_tile = min(row_cap, max(min_rows, (rows_affordable // sub) * sub))
    return row_tile, hw_tile


def _pool_oss_kernel_1step(x_ref, o_ref, *, offset, mult, shift_mult, qmin, qmax):
    # hw_tile == HW: the full reduction axis is in this tile.  The lane sum is
    # elementwise vreg adds (VALU) plus a single cross-lane reduce (XLU) per
    # row tile, so no accumulator scratch is needed.
    x = x_ref[...].astype(jnp.float32)
    s = jnp.round(jnp.sum(x, axis=-1, keepdims=True))      # ReduceSum + RoundModule
    y = (s + offset) * mult                                 # TINPUOffsetScaleShift
    y = y * shift_mult
    o_ref[...] = jnp.clip(jnp.floor(y), qmin, qmax)


def _pool_oss_kernel_tiled(x_ref, o_ref, acc_ref, *, offset, mult, shift_mult,
                           qmin, qmax, hw, hw_tile, ragged_hw):
    # acc_ref: (row_tile, 128) f32 lane-dense accumulator, resident across the
    # HW ("arbitrary") grid axis.  Per-step work is pure VPU adds; the single
    # XLU cross-lane reduce happens once per row tile in the finalize.
    k = pl.program_id(1)
    last_k = pl.num_programs(1) - 1
    n_chunks = hw_tile // 128                 # hw_tile is a multiple of 128 here

    @pl.when(k == 0)
    def _init():
        acc_ref[...] = jnp.zeros_like(acc_ref)

    def accumulate(x):
        chunks = [x[:, j * 128:(j + 1) * 128] for j in range(n_chunks)]
        while len(chunks) > 1:                # pairwise add tree (VALU)
            nxt = [a + b for a, b in zip(chunks[0::2], chunks[1::2])]
            if len(chunks) % 2:
                nxt.append(chunks[-1])
            chunks = nxt
        acc_ref[...] += chunks[0]

    if ragged_hw:
        # Only the final HW tile is partial: keep the mask off the hot path.
        @pl.when(k != last_k)
        def _full_tile():
            accumulate(x_ref[...].astype(jnp.float32))

        @pl.when(k == last_k)
        def _ragged_tile():
            x = x_ref[...].astype(jnp.float32)
            col = jax.lax.broadcasted_iota(jnp.int32, x.shape, 1)
            x = jnp.where(k * hw_tile + col < hw, x, 0.0)
            accumulate(x)
    else:
        accumulate(x_ref[...].astype(jnp.float32))

    @pl.when(k == last_k)
    def _finalize():
        s = jnp.round(jnp.sum(acc_ref[...], axis=-1, keepdims=True))
        y = (s + offset) * mult
        y = y * shift_mult
        o_ref[...] = jnp.clip(jnp.floor(y), qmin, qmax)


def adaptive_avg_pool2d_tinpu(x, *, activation_bw=8, num_bits_scale=1,
                              vmem_budget_bytes=None):
    """x: (N, C, H, W) with a float32 / bfloat16 / int8 carrier dtype.
    Returns the (N, C) float32 quantized adaptive-avg-pool output."""
    N, C, H, W = x.shape
    area = H * W
    offset, mult, shift_mult = compute_offset_scale_shift(
        1, 1.0 / area, num_bits_scale=num_bits_scale)
    qmin = float(-2 ** (activation_bw - 1))
    qmax = float(2 ** (activation_bw - 1) - 1)

    # Free reshape (no copy, no dtype widening): reduction axis on lanes.
    x2 = x.reshape(N * C, H * W)
    NC, HW = x2.shape
    itemsize = jnp.dtype(x2.dtype).itemsize
    sub = _sublane_multiple(itemsize)

    row_tile, hw_tile = _choose_tiles(NC, HW, itemsize, vmem_budget_bytes)
    if _cdiv(HW, hw_tile) <= 1:
        hw_tile = HW                           # single-step path: full-dim block
    num_i = _cdiv(NC, row_tile)                # ragged last row tile: partial blocks
    num_k = _cdiv(HW, hw_tile)                 # ragged last hw tile: masked in-kernel
    ragged_hw = (HW % hw_tile) != 0

    # Explicit VMEM limit from the real (lane/sublane padded) footprint.
    in_rows = _round_up(row_tile, sub)
    f32_rows = _round_up(row_tile, 8)
    footprint = (2 * in_rows * _round_up(hw_tile, 128) * itemsize   # input double-buffer
                 + 2 * f32_rows * 128 * 4)                          # (rows,1) out DB pads to 128 lanes
    if num_k > 1:
        footprint += f32_rows * 128 * 4                             # acc scratch
    try:
        phys_vmem = pltpu.get_tpu_info().vmem_capacity_bytes
    except Exception:
        phys_vmem = 64 * 1024 * 1024
    vmem_limit = int(min(footprint + 8 * 1024 * 1024, phys_vmem))

    cost = pl.CostEstimate(flops=NC * HW, transcendentals=0,
                           bytes_accessed=NC * HW * itemsize + NC * 4)

    common = dict(offset=offset, mult=mult, shift_mult=shift_mult,
                  qmin=qmin, qmax=qmax)

    if num_k == 1:
        kernel = functools.partial(_pool_oss_kernel_1step, **common)
        grid_spec = pltpu.PrefetchScalarGridSpec(
            num_scalar_prefetch=0,
            grid=(num_i,),
            in_specs=[pl.BlockSpec((row_tile, hw_tile), lambda i: (i, 0))],
            out_specs=pl.BlockSpec((row_tile, 1), lambda i: (i, 0)),
            scratch_shapes=[])
        dims = ("parallel",)
    else:
        kernel = functools.partial(_pool_oss_kernel_tiled, **common,
                                   hw=HW, hw_tile=hw_tile, ragged_hw=ragged_hw)
        grid_spec = pltpu.PrefetchScalarGridSpec(
            num_scalar_prefetch=0,
            grid=(num_i, num_k),
            in_specs=[pl.BlockSpec((row_tile, hw_tile), lambda i, k: (i, k))],
            out_specs=pl.BlockSpec((row_tile, 1), lambda i, k: (i, 0)),
            scratch_shapes=[pltpu.VMEM((row_tile, 128), jnp.float32)])
        dims = ("parallel", "arbitrary")

    out = pl.pallas_call(
        kernel,
        out_shape=jax.ShapeDtypeStruct((NC, 1), jnp.float32),
        grid_spec=grid_spec,
        compiler_params=pltpu.CompilerParams(
            dimension_semantics=dims,
            vmem_limit_bytes=vmem_limit),
        cost_estimate=cost,
    )(x2)
    return out.reshape(N, C)


def _reference(x, *, activation_bw=8, num_bits_scale=1):
    """Pure-JAX reference mirroring the PyTorch forward (unfused form)."""
    N, C, H, W = x.shape
    area = H * W
    offset, mult, shift_mult = compute_offset_scale_shift(
        1, 1.0 / area, num_bits_scale=num_bits_scale)
    qmin = -2 ** (activation_bw - 1)
    qmax = 2 ** (activation_bw - 1) - 1
    s = jnp.round(jnp.sum(x.astype(jnp.float32), axis=(2, 3)))
    y = (s + offset) * mult
    y = y * shift_mult
    return jnp.clip(jnp.floor(y), qmin, qmax)


if __name__ == "__main__":
    key = jax.random.PRNGKey(0)
    N, C, H, W = 2, 4, 16, 16
    # int8-like activations (float carrier), deterministic.
    x = jnp.round(jax.random.uniform(key, (N, C, H, W), jnp.float32,
                                     minval=-128.0, maxval=127.0))

    # 1) float32 carrier, single-step (full-HW) path.
    out = jax.block_until_ready(adaptive_avg_pool2d_tinpu(x))
    ref = _reference(x)
    assert out.shape == (N, C), out.shape
    assert jnp.allclose(out, ref), (out, ref)

    # 2) int8 carrier: wrapper does not widen; kernel upcasts on load
    #    (4x fewer HBM bytes streamed on all generations).
    x_i8 = x.astype(jnp.int8)
    out_i8 = jax.block_until_ready(adaptive_avg_pool2d_tinpu(x_i8))
    ref_i8 = _reference(x_i8.astype(jnp.float32))
    assert jnp.allclose(out_i8, ref_i8), (out_i8, ref_i8)

    # 3) Force the HW-tiled path (lane-dense accumulator + gated ragged mask)
    #    with a tiny artificial VMEM budget on a non-128-multiple H*W.
    x_big = jnp.round(jax.random.uniform(jax.random.PRNGKey(0), (2, 4, 20, 20),
                                         jnp.float32, minval=-128.0, maxval=127.0))
    out_big = jax.block_until_ready(
        adaptive_avg_pool2d_tinpu(x_big, vmem_budget_bytes=8 * 1024))
    ref_big = _reference(x_big)
    assert jnp.allclose(out_big, ref_big), (out_big, ref_big)

    print("KERNEL_OK")
</pallas_src>

<mosaic_0001>
module attributes {stable_mosaic.version = 11 : i64} {
  func.func @_pool_oss_kernel_1step(%arg0: i32, %arg1: memref<8x256xf32, #tpu.memory_space<vmem>>, %arg2: memref<8x1xf32, #tpu.memory_space<vmem>>) attributes {dimension_semantics = [#tpu.dimension_semantics<parallel>], iteration_bounds = array<i64: 1>, scalar_prefetch = 0 : i64, scratch_operands = 0 : i64, tpu.core_type = #tpu.core_type<tc>, window_params = [{transform_indices = @transform_0, window_bounds = array<i64: 8, 256>}, {transform_indices = @transform_1, window_bounds = array<i64: 8, 1>}]} {
    %c0 = arith.constant 0 : index
    %c0_0 = arith.constant 0 : index
    %0 = vector.load %arg1[%c0, %c0_0] : memref<8x256xf32, #tpu.memory_space<vmem>>, vector<8x256xf32>
    %cst = arith.constant dense<0.000000e+00> : vector<8xf32>
    %1 = vector.multi_reduction <add>, %0, %cst [1] : vector<8x256xf32> to vector<8xf32>
    %2 = vector.shape_cast %1 : vector<8xf32> to vector<8x1xf32>
    %3 = math.roundeven %2 : vector<8x1xf32>
    %cst_1 = arith.constant 1.000000e+00 : f32
    %4 = vector.broadcast %cst_1 : f32 to vector<8x1xf32>
    %5 = arith.addf %3, %4 : vector<8x1xf32>
    %cst_2 = arith.constant 1.000000e+00 : f32
    %6 = vector.broadcast %cst_2 : f32 to vector<8x1xf32>
    %7 = arith.mulf %5, %6 : vector<8x1xf32>
    %cst_3 = arith.constant 3.906250e-03 : f32
    %8 = vector.broadcast %cst_3 : f32 to vector<8x1xf32>
    %9 = arith.mulf %7, %8 : vector<8x1xf32>
    %10 = math.floor %9 : vector<8x1xf32>
    %cst_4 = arith.constant -1.280000e+02 : f32
    %cst_5 = arith.constant 1.270000e+02 : f32
    %11 = vector.broadcast %cst_4 : f32 to vector<8x1xf32>
    %12 = arith.maximumf %11, %10 : vector<8x1xf32>
    %13 = vector.broadcast %cst_5 : f32 to vector<8x1xf32>
    %14 = arith.minimumf %13, %12 : vector<8x1xf32>
    %c0_6 = arith.constant 0 : index
    %c0_7 = arith.constant 0 : index
    %15 = vector.load %arg2[%c0_6, %c0_7] : memref<8x1xf32, #tpu.memory_space<vmem>>, vector<8x1xf32>
    tpu.vector_store %arg2[%c0_6, %c0_7], %14 {strides = array<i32>} : memref<8x1xf32, #tpu.memory_space<vmem>>, vector<8x1xf32>,
    return
  }
  func.func @transform_0(%arg0: i32) -> (i32, i32) {
    %c0_i32 = arith.constant 0 : i32
    %c0_i32_0 = arith.constant 0 : i32
    return %arg0, %c0_i32 : i32, i32
  }
  func.func @transform_1(%arg0: i32) -> (i32, i32) {
    %c0_i32 = arith.constant 0 : i32
    %c0_i32_0 = arith.constant 0 : i32
    return %arg0, %c0_i32 : i32, i32
  }
}

</mosaic_0001>

<llo_original>
// kernel: tpu_custom_call.1
$region0: #{tpu_custom_call.1}
  #allocation0 [shape = 'u32[]', space=smem, size = 0x4, offset = 0x4, fixed_abs, tag = 'smem constant byte address 0x4 - core index']
  #allocation1 [shape = 'u32[144,128]{1,0:T(1,128)}', space=vmem, size = 0x12000, scoped, tag = 'internal scratch']
  %s0 = inlined_call_operand.hbm [shape: f32[8,256], index: 0, kind: input, shape index: {}]
  %s1 = inlined_call_operand.vmem [shape: f32[8,1], index: 1, kind: output, shape index: {}]
  %s2 = sld [smem:[#allocation0]]
  $region18: #{tpu_custom_call.1} parent=0
    _
  %s4 = ssub.s32 1, %s2
  %s5 = scalar_select 0, %s4, %s2
  $region1: #{tpu_custom_call.1} parent=0
    #allocation2 [shape = 'u8[8192]{0}', space=vmem, size = 0x2000, scoped, tag = 'input window, operand 0, single buffered']
    #allocation3 [shape = 's32[1]{0}', space=sflag, size = 0x4, scoped, tag = 'scoped memory for tpu_custom_call.1']
    %6 = vsyncpa [#allocation3], 0
    // Predicated region
    $region2: #{tpu_custom_call.1} parent=1 // pred_check
      _
    $region3: #{tpu_custom_call.1} parent=1 // pred_check_branch
      %8 = sbr.rel (0) target = $region5
    $region4: #{tpu_custom_call.1} parent=1 // pred_region
      %s10 = ssub.s32 256, 256
      %11 = vsyncadd [#allocation3], %s10
      %s13 = sshll.u32 [#allocation2], 4
      %s14 = int_to_ptr.vmem [resolvable:$true] %s13
      %16 = dma.hbm_to_vmem [thread:$0]  %s0, 256, %s14, [#allocation3]
    $region5: #{tpu_custom_call.1} parent=1 // pred_fallthru
      _
    // Predicated region
    $region6: #{tpu_custom_call.1} parent=1 // pred_check
      _
    $region7: #{tpu_custom_call.1} parent=1 // pred_check_branch
      %18 = sbr.rel (0) target = $region9
    $region8: #{tpu_custom_call.1} parent=1 // pred_region
      %19 = dma.done [#allocation3], 256
    $region9: #{tpu_custom_call.1} parent=1 // pred_fallthru
      _
    %v20 = vld [vmem:[#allocation2] sm:$0xff]
    %v21 = vld [vmem:[#allocation2 + $0x8] sm:$0xff]
    %v22 = vadd.f32 %v20, %v21
    %23 = vadd.xlane.f32.xlu0 %v22
    %v24 = vpop.xlane.xlu0 %23
    %v25 = vround.ne.pseudo %v24
    %v26 = vadd.f32 %v25, 1.0
    %v27 = vmul.f32 %v26, 0.00390625
    %v28 = vfloor.f32 %v27
    %v29 = vmax.f32 %v28, -128.0
    %v30 = vmin.f32 %v29, 127.0
    %vm31 = vcmask 7168
    %32 = vst.msk [vmem:[%s1] sm:$0xff] %vm31, %v30
    // Predicated region
    $region10: #{tpu_custom_call.1} parent=1 // pred_check
      _
    $region11: #{tpu_custom_call.1} parent=1 // pred_check_branch
      %34 = sbr.rel (0) target = $region13
    $region12: #{tpu_custom_call.1} parent=1 // pred_region
      _
    $region13: #{tpu_custom_call.1} parent=1 // pred_fallthru
      _
    // Predicated region
    $region14: #{tpu_custom_call.1} parent=1 // pred_check
      _
    $region15: #{tpu_custom_call.1} parent=1 // pred_check_branch
      %36 = sbr.rel (0) target = $region17
    $region16: #{tpu_custom_call.1} parent=1 // pred_region
      _
    $region17: #{tpu_custom_call.1} parent=1 // pred_fallthru
      _
    %37 = vsyncpa [#allocation3], 1

</llo_original>
